<compile_context>
chip_gen: v6e
topology: v6e:2x2x1
jax: 0.10.0
libtpu: 0.0.40
codegen_flags: <defaults>
</compile_context>

<pallas_src>
import jax
import jax.numpy as jnp
from jax import lax
from jax.experimental import pallas as pl
from jax.experimental.pallas import tpu as pltpu

SELU_ALPHA = 1.6732632423543772848170429916717
SELU_SCALE = 1.0507009873554804934193349852946

# Conservative cross-generation VMEM accounting:
#   v7x : 64 MiB physical per TC (32 MiB default scoped)
#   v6e : 128 MiB physical (32 MiB default scoped)
#   v5e : 128 MiB physical (16 MiB default scoped)
# Target our explicit buffers at <= ~36 MiB and raise the scoped limit to 48 MiB:
# fits every generation with headroom for Mosaic-internal scratch.
_VMEM_TARGET_BYTES = 36 * 1024 * 1024
_VMEM_LIMIT_BYTES = 48 * 1024 * 1024
_MAX_TB = 8192


def _round_up(x, m):
    return (x + m - 1) // m * m


def _vanilla_kernel(x_ref, w1_ref, b1_ref, wd_ref, bd_ref, o_ref):
    # x_ref:  [TB, F]  batch tile, at-rest dtype (cast to compute dtype in-register)
    # w1_ref: [F, H]   resident, compute dtype
    # b1_ref: [1, H]   f32, resident
    # wd_ref: [1, H]   (w2[1] - w2[0]), resident, compute dtype
    # bd_ref: [1, 1]   (b2[1] - b2[0]), f32, resident
    # o_ref:  [2, TB]  lane-dense transposed output (classes on sublanes)
    x = x_ref[...].astype(w1_ref.dtype)                                   # in-kernel cast
    h = jnp.dot(x, w1_ref[...], preferred_element_type=jnp.float32)      # [TB, H] f32
    h = h + b1_ref[...]
    # SELU (exp of the dead branch is selected away; forward-only so +inf is benign).
    h = SELU_SCALE * jnp.where(h > 0, h, SELU_ALPHA * (jnp.exp(h) - 1.0))
    h = h.astype(wd_ref.dtype)

    # 2-class head folded into one difference vector:
    #   d = (w2[1]-w2[0]) . h^T + (b2[1]-b2[0])   -> [1, TB]
    # (NT dimension numbers -> no materialized transpose of h).
    d = lax.dot_general(
        wd_ref[...], h,
        dimension_numbers=(((1,), (1,)), ((), ())),
        preferred_element_type=jnp.float32,
    )
    d = d + bd_ref[...]                                                   # [1, TB]

    # softmax over 2 classes == sigmoid(d), numerically stable form.
    # Reciprocal goes to the EUP slot (approx).
    e = jnp.exp(-jnp.abs(d))
    inv = pl.reciprocal(1.0 + e, approx=True)
    p1 = jnp.where(d >= 0, inv, e * inv)                                  # sigmoid(d)
    o_ref[0:1, :] = (1.0 - p1).astype(o_ref.dtype)
    o_ref[1:2, :] = p1.astype(o_ref.dtype)


def _choose_batch_tile(B, F, H, x_itemsize, w_itemsize, block_b=None):
    """Largest batch tile (multiple of 128) that fits the cross-generation VMEM budget."""
    F_pad = _round_up(F, 128)     # lanes are padded, so VMEM cost uses the padded width
    H_pad = _round_up(H, 128)
    # Per-batch-row cost: double-buffered x tile + f32 h intermediate (+ SELU temps)
    # + (8, TB) f32 output tile x 2 buffers.
    per_row = 2 * F_pad * x_itemsize + 2 * H_pad * 4 + 2 * 8 * 4
    # Resident weights: assume worst-case double buffering even though we request
    # single buffering, so the fallback path still fits.
    resident = 2 * (_round_up(F, 8) * H_pad * w_itemsize      # w1
                    + 8 * H_pad * 4                           # b1
                    + 8 * H_pad * w_itemsize                  # wd
                    + 8 * 128 * 4)                            # bd
    avail = _VMEM_TARGET_BYTES - resident
    if avail > 128 * per_row:
        tb = max(128, (avail // per_row) // 128 * 128)
    else:
        tb = 128
    tb = min(tb, _MAX_TB)
    if block_b is not None:
        tb = min(tb, max(128, _round_up(block_b, 128)))
    tb = min(tb, _round_up(B, 128))            # never bigger than the (rounded) data
    # v7x has 2 TensorCores: keep >= 2 grid steps so the parallel batch axis feeds both.
    while tb > 128 and (B + tb - 1) // tb < 2:
        tb = max(128, _round_up(tb // 2, 128))
    return int(tb)


def vanilla_forward(x, w1, b1, w2, b2, *, block_b=None, compute_dtype=jnp.float32):
    """Forward pass of `Vanilla`.

    x:  [B, F]
    w1: [F, H]  (torch linear_1.weight transposed)
    b1: [1, H]
    w2: [2, H]  (torch linear_2.weight, native layout)
    b2: [2, 1]
    returns [B, 2] float32 softmax probabilities (softmax over dim=1).
    """
    B, F = x.shape
    H = w1.shape[1]
    assert w1.shape == (F, H) and b1.shape == (1, H)
    assert w2.shape == (2, H) and b2.shape == (2, 1)

    # Only the (tiny) weights are cast in the wrapper; x stays in its at-rest dtype
    # and is cast in-kernel, so the bf16 path never adds an extra HBM pass over x.
    w1c = w1.astype(compute_dtype)
    b1f = b1.astype(jnp.float32)
    wd = (w2[1:2, :] - w2[0:1, :]).astype(compute_dtype)      # [1, H]
    bd = (b2[1:2, :] - b2[0:1, :]).astype(jnp.float32)        # [1, 1]

    x_item = jnp.dtype(x.dtype).itemsize
    w_item = jnp.dtype(compute_dtype).itemsize
    tb = _choose_batch_tile(B, F, H, x_item, w_item, block_b)
    num_blocks = (B + tb - 1) // tb
    b_out = num_blocks * tb        # only the tiny [2, b_out] output is padded, not x

    pad_rows = b_out - B
    if pad_rows and num_blocks == 1:
        # Single-tile case: padding is a handful of rows -> negligible, and it removes
        # any undefined data in the tail (tail values would be discarded anyway).
        x = jnp.pad(x, ((0, pad_rows), (0, 0)))

    cost = pl.CostEstimate(
        flops=int(2 * B * F * H + 2 * B * H + 10 * B * H),
        transcendentals=int(B * H + B),
        bytes_accessed=int(B * F * x_item + F * H * w_item + H * (4 + w_item)
                           + 2 * b_out * 4),
    )

    def build(single_buffer_weights):
        def wspec(shape):
            if single_buffer_weights:
                return pl.BlockSpec(shape, lambda i: (0,) * len(shape),
                                    pipeline_mode=pl.Buffered(1))
            return pl.BlockSpec(shape, lambda i: (0,) * len(shape))

        return pl.pallas_call(
            _vanilla_kernel,
            out_shape=jax.ShapeDtypeStruct((2, b_out), jnp.float32),
            grid=(num_blocks,),
            in_specs=[
                pl.BlockSpec((tb, F), lambda i: (i, 0)),   # x: streamed per batch tile
                wspec((F, H)),                             # w1: resident in VMEM
                wspec((1, H)),                             # b1: resident
                wspec((1, H)),                             # wd: resident
                wspec((1, 1)),                             # bd: resident
            ],
            out_specs=pl.BlockSpec((2, tb), lambda i: (0, i)),
            compiler_params=pltpu.CompilerParams(
                dimension_semantics=("parallel",),         # shard batch tiles across TCs
                vmem_limit_bytes=_VMEM_LIMIT_BYTES,        # needed on v5e/v6e defaults
            ),
            cost_estimate=cost,
        )

    try:
        out_t = build(True)(x, w1c, b1f, wd, bd)
    except Exception:
        # Fallback if this JAX build rejects single-buffered (Buffered(1)) specs.
        out_t = build(False)(x, w1c, b1f, wd, bd)

    # Layout plumbing back to the PyTorch convention: [B, 2].
    return out_t[:, :B].T


def init_params(key, n_feats, num_nodes):
    """Deterministic init mimicking torch.nn.Linear (uniform +/- 1/sqrt(fan_in))."""
    k1, k2, k3, k4 = jax.random.split(key, 4)
    bound1 = 1.0 / (n_feats ** 0.5)
    bound2 = 1.0 / (num_nodes ** 0.5)
    w1 = jax.random.uniform(k1, (n_feats, num_nodes), jnp.float32, -bound1, bound1)  # [F, H]
    b1 = jax.random.uniform(k2, (1, num_nodes), jnp.float32, -bound1, bound1)        # [1, H]
    w2 = jax.random.uniform(k3, (2, num_nodes), jnp.float32, -bound2, bound2)        # [2, H]
    b2 = jax.random.uniform(k4, (2, 1), jnp.float32, -bound2, bound2)                # [2, 1]
    return w1, b1, w2, b2


if __name__ == "__main__":
    key = jax.random.PRNGKey(0)
    batch_size, n_feats, num_nodes = 8, 32, 32

    kx, kp = jax.random.split(key)
    x = jax.random.normal(kx, (batch_size, n_feats), jnp.float32)
    w1, b1, w2, b2 = init_params(kp, n_feats, num_nodes)

    # Pure-JAX reference.
    h_ref = x @ w1 + b1
    h_ref = SELU_SCALE * jnp.where(h_ref > 0, h_ref, SELU_ALPHA * (jnp.exp(h_ref) - 1.0))
    logits_ref = h_ref @ w2.T + b2.T
    ref = jax.nn.softmax(logits_ref, axis=-1)

    # f32 path (approx EUP reciprocal trades a few ulps -> 2e-3 tolerance).
    out = jax.block_until_ready(vanilla_forward(x, w1, b1, w2, b2))
    assert out.shape == (batch_size, 2)
    assert jnp.allclose(out, ref, atol=2e-3, rtol=2e-3)
    assert jnp.allclose(out.sum(axis=-1), 1.0, atol=1e-5)

    # bf16 MXU path: x DMA'd as f32 (no wrapper cast), cast in-kernel; looser tolerance.
    out_bf16 = jax.block_until_ready(
        vanilla_forward(x, w1, b1, w2, b2, compute_dtype=jnp.bfloat16))
    assert out_bf16.shape == (batch_size, 2)
    assert jnp.allclose(out_bf16, ref, atol=5e-2, rtol=5e-2)
    assert jnp.allclose(out_bf16.sum(axis=-1), 1.0, atol=1e-3)

    print("KERNEL_OK")
</pallas_src>

<mosaic_0001>
module attributes {stable_mosaic.version = 11 : i64} {
  func.func @_vanilla_kernel(%arg0: i32, %arg1: memref<128x32xf32, #tpu.memory_space<vmem>>, %arg2: memref<32x32xf32, #tpu.memory_space<vmem>>, %arg3: memref<1x32xf32, #tpu.memory_space<vmem>>, %arg4: memref<1x32xf32, #tpu.memory_space<vmem>>, %arg5: memref<1x1xf32, #tpu.memory_space<vmem>>, %arg6: memref<2x128xf32, #tpu.memory_space<vmem>>) attributes {dimension_semantics = [#tpu.dimension_semantics<parallel>], iteration_bounds = array<i64: 1>, scalar_prefetch = 0 : i64, scratch_operands = 0 : i64, tpu.core_type = #tpu.core_type<tc>, window_params = [{transform_indices = @transform_0, window_bounds = array<i64: 128, 32>}, {pipeline_mode = #tpu.pipeline_mode<synchronous>, transform_indices = @transform_1, window_bounds = array<i64: 32, 32>}, {pipeline_mode = #tpu.pipeline_mode<synchronous>, transform_indices = @transform_2, window_bounds = array<i64: 1, 32>}, {pipeline_mode = #tpu.pipeline_mode<synchronous>, transform_indices = @transform_3, window_bounds = array<i64: 1, 32>}, {pipeline_mode = #tpu.pipeline_mode<synchronous>, transform_indices = @transform_4, window_bounds = array<i64: 1, 1>}, {transform_indices = @transform_5, window_bounds = array<i64: 2, 128>}]} {
    %c0 = arith.constant 0 : index
    %c0_0 = arith.constant 0 : index
    %0 = vector.load %arg1[%c0, %c0_0] : memref<128x32xf32, #tpu.memory_space<vmem>>, vector<128x32xf32>
    %c0_1 = arith.constant 0 : index
    %c0_2 = arith.constant 0 : index
    %1 = vector.load %arg2[%c0_1, %c0_2] : memref<32x32xf32, #tpu.memory_space<vmem>>, vector<32x32xf32>
    %cst = arith.constant dense<0.000000e+00> : vector<128x32xf32>
    %2 = tpu.matmul %0, %1, %cst {dimension_numbers = #tpu.dot_dimension_numbers<[1], [0], [0], [1], [0, 0, 1, 1], [], []>} : vector<128x32xf32>, vector<32x32xf32>, vector<128x32xf32> -> vector<128x32xf32>
    %c0_3 = arith.constant 0 : index
    %c0_4 = arith.constant 0 : index
    %3 = vector.load %arg3[%c0_3, %c0_4] : memref<1x32xf32, #tpu.memory_space<vmem>>, vector<1x32xf32>
    %4 = vector.broadcast %3 : vector<1x32xf32> to vector<128x32xf32>
    %5 = arith.addf %2, %4 : vector<128x32xf32>
    %cst_5 = arith.constant 0.000000e+00 : f32
    %6 = vector.broadcast %cst_5 : f32 to vector<128x32xf32>
    %7 = arith.cmpf ogt, %5, %6 : vector<128x32xf32>
    %8 = math.exp %5 : vector<128x32xf32>
    %cst_6 = arith.constant 1.000000e+00 : f32
    %9 = vector.broadcast %cst_6 : f32 to vector<128x32xf32>
    %10 = arith.subf %8, %9 : vector<128x32xf32>
    %cst_7 = arith.constant 1.67326319 : f32
    %11 = vector.broadcast %cst_7 : f32 to vector<128x32xf32>
    %12 = arith.mulf %11, %10 : vector<128x32xf32>
    %13 = arith.select %7, %5, %12 : vector<128x32xi1>, vector<128x32xf32>
    %cst_8 = arith.constant 1.05070102 : f32
    %14 = vector.broadcast %cst_8 : f32 to vector<128x32xf32>
    %15 = arith.mulf %14, %13 : vector<128x32xf32>
    %c0_9 = arith.constant 0 : index
    %c0_10 = arith.constant 0 : index
    %16 = vector.load %arg4[%c0_9, %c0_10] : memref<1x32xf32, #tpu.memory_space<vmem>>, vector<1x32xf32>
    %cst_11 = arith.constant dense<0.000000e+00> : vector<1x128xf32>
    %17 = tpu.matmul %16, %15, %cst_11 {dimension_numbers = #tpu.dot_dimension_numbers<[1], [1], [0], [0], [0, 0, 1, 0], [], []>} : vector<1x32xf32>, vector<128x32xf32>, vector<1x128xf32> -> vector<1x128xf32>
    %c0_12 = arith.constant 0 : index
    %c0_13 = arith.constant 0 : index
    %18 = vector.load %arg5[%c0_12, %c0_13] : memref<1x1xf32, #tpu.memory_space<vmem>>, vector<1x1xf32>
    %19 = vector.broadcast %18 : vector<1x1xf32> to vector<1x128xf32>
    %20 = arith.addf %17, %19 : vector<1x128xf32>
    %21 = math.absf %20 : vector<1x128xf32>
    %cst_14 = arith.constant 0.000000e+00 : f32
    %22 = vector.broadcast %cst_14 : f32 to vector<1x128xf32>
    %23 = arith.subf %22, %21 : vector<1x128xf32>
    %24 = math.exp %23 : vector<1x128xf32>
    %cst_15 = arith.constant 1.000000e+00 : f32
    %25 = vector.broadcast %cst_15 : f32 to vector<1x128xf32>
    %26 = arith.addf %25, %24 : vector<1x128xf32>
    %27 = tpu.reciprocal %26 {approx = true} : vector<1x128xf32> -> vector<1x128xf32>
    %cst_16 = arith.constant 0.000000e+00 : f32
    %28 = vector.broadcast %cst_16 : f32 to vector<1x128xf32>
    %29 = arith.cmpf oge, %20, %28 : vector<1x128xf32>
    %30 = arith.mulf %24, %27 : vector<1x128xf32>
    %31 = arith.select %29, %27, %30 : vector<1x128xi1>, vector<1x128xf32>
    %cst_17 = arith.constant 1.000000e+00 : f32
    %32 = vector.broadcast %cst_17 : f32 to vector<1x128xf32>
    %33 = arith.subf %32, %31 : vector<1x128xf32>
    %c0_18 = arith.constant 0 : index
    %c0_19 = arith.constant 0 : index
    %34 = vector.load %arg6[%c0_18, %c0_19] : memref<2x128xf32, #tpu.memory_space<vmem>>, vector<1x128xf32>
    tpu.vector_store %arg6[%c0_18, %c0_19], %33 {strides = array<i32>} : memref<2x128xf32, #tpu.memory_space<vmem>>, vector<1x128xf32>,
    %c1 = arith.constant 1 : index
    %c0_20 = arith.constant 0 : index
    %35 = vector.load %arg6[%c1, %c0_20] : memref<2x128xf32, #tpu.memory_space<vmem>>, vector<1x128xf32>
    tpu.vector_store %arg6[%c1, %c0_20], %31 {strides = array<i32>} : memref<2x128xf32, #tpu.memory_space<vmem>>, vector<1x128xf32>,
    return
  }
  func.func @transform_0(%arg0: i32) -> (i32, i32) {
    %c0_i32 = arith.constant 0 : i32
    %c0_i32_0 = arith.constant 0 : i32
    return %arg0, %c0_i32 : i32, i32
  }
  func.func @transform_1(%arg0: i32) -> (i32, i32) {
    %c0_i32 = arith.constant 0 : i32
    %c0_i32_0 = arith.constant 0 : i32
    %c0_i32_1 = arith.constant 0 : i32
    return %c0_i32, %c0_i32_0 : i32, i32
  }
  func.func @transform_2(%arg0: i32) -> (i32, i32) {
    %c0_i32 = arith.constant 0 : i32
    %c0_i32_0 = arith.constant 0 : i32
    %c0_i32_1 = arith.constant 0 : i32
    return %c0_i32, %c0_i32_0 : i32, i32
  }
  func.func @transform_3(%arg0: i32) -> (i32, i32) {
    %c0_i32 = arith.constant 0 : i32
    %c0_i32_0 = arith.constant 0 : i32
    %c0_i32_1 = arith.constant 0 : i32
    return %c0_i32, %c0_i32_0 : i32, i32
  }
  func.func @transform_4(%arg0: i32) -> (i32, i32) {
    %c0_i32 = arith.constant 0 : i32
    %c0_i32_0 = arith.constant 0 : i32
    %c0_i32_1 = arith.constant 0 : i32
    return %c0_i32, %c0_i32_0 : i32, i32
  }
  func.func @transform_5(%arg0: i32) -> (i32, i32) {
    %c0_i32 = arith.constant 0 : i32
    %c0_i32_0 = arith.constant 0 : i32
    return %c0_i32, %arg0 : i32, i32
  }
}

module attributes {stable_mosaic.version = 11 : i64} {
  func.func @_vanilla_kernel(%arg0: i32, %arg1: memref<128x32xf32, #tpu.memory_space<vmem>>, %arg2: memref<32x32xf32, #tpu.memory_space<vmem>>, %arg3: memref<1x32xf32, #tpu.memory_space<vmem>>, %arg4: memref<1x32xf32, #tpu.memory_space<vmem>>, %arg5: memref<1x1xf32, #tpu.memory_space<vmem>>, %arg6: memref<2x128xf32, #tpu.memory_space<vmem>>) attributes {dimension_semantics = [#tpu.dimension_semantics<parallel>], iteration_bounds = array<i64: 1>, scalar_prefetch = 0 : i64, scratch_operands = 0 : i64, tpu.core_type = #tpu.core_type<tc>, window_params = [{transform_indices = @transform_0, window_bounds = array<i64: 128, 32>}, {pipeline_mode = #tpu.pipeline_mode<synchronous>, transform_indices = @transform_1, window_bounds = array<i64: 32, 32>}, {pipeline_mode = #tpu.pipeline_mode<synchronous>, transform_indices = @transform_2, window_bounds = array<i64: 1, 32>}, {pipeline_mode = #tpu.pipeline_mode<synchronous>, transform_indices = @transform_3, window_bounds = array<i64: 1, 32>}, {pipeline_mode = #tpu.pipeline_mode<synchronous>, transform_indices = @transform_4, window_bounds = array<i64: 1, 1>}, {transform_indices = @transform_5, window_bounds = array<i64: 2, 128>}]} {
    %c0 = arith.constant 0 : index
    %c0_0 = arith.constant 0 : index
    %0 = vector.load %arg1[%c0, %c0_0] : memref<128x32xf32, #tpu.memory_space<vmem>>, vector<128x32xf32>
    %c0_1 = arith.constant 0 : index
    %c0_2 = arith.constant 0 : index
    %1 = vector.load %arg2[%c0_1, %c0_2] : memref<32x32xf32, #tpu.memory_space<vmem>>, vector<32x32xf32>
    %cst = arith.constant dense<0.000000e+00> : vector<128x32xf32>
    %2 = tpu.matmul %0, %1, %cst {dimension_numbers = #tpu.dot_dimension_numbers<[1], [0], [0], [1], [0, 0, 1, 1], [], []>} : vector<128x32xf32>, vector<32x32xf32>, vector<128x32xf32> -> vector<128x32xf32>
    %c0_3 = arith.constant 0 : index
    %c0_4 = arith.constant 0 : index
    %3 = vector.load %arg3[%c0_3, %c0_4] : memref<1x32xf32, #tpu.memory_space<vmem>>, vector<1x32xf32>
    %4 = vector.broadcast %3 : vector<1x32xf32> to vector<128x32xf32>
    %5 = arith.addf %2, %4 : vector<128x32xf32>
    %cst_5 = arith.constant 0.000000e+00 : f32
    %6 = vector.broadcast %cst_5 : f32 to vector<128x32xf32>
    %7 = arith.cmpf ogt, %5, %6 : vector<128x32xf32>
    %8 = math.exp %5 : vector<128x32xf32>
    %cst_6 = arith.constant 1.000000e+00 : f32
    %9 = vector.broadcast %cst_6 : f32 to vector<128x32xf32>
    %10 = arith.subf %8, %9 : vector<128x32xf32>
    %cst_7 = arith.constant 1.67326319 : f32
    %11 = vector.broadcast %cst_7 : f32 to vector<128x32xf32>
    %12 = arith.mulf %11, %10 : vector<128x32xf32>
    %13 = arith.select %7, %5, %12 : vector<128x32xi1>, vector<128x32xf32>
    %cst_8 = arith.constant 1.05070102 : f32
    %14 = vector.broadcast %cst_8 : f32 to vector<128x32xf32>
    %15 = arith.mulf %14, %13 : vector<128x32xf32>
    %c0_9 = arith.constant 0 : index
    %c0_10 = arith.constant 0 : index
    %16 = vector.load %arg4[%c0_9, %c0_10] : memref<1x32xf32, #tpu.memory_space<vmem>>, vector<1x32xf32>
    %cst_11 = arith.constant dense<0.000000e+00> : vector<1x128xf32>
    %17 = tpu.matmul %16, %15, %cst_11 {dimension_numbers = #tpu.dot_dimension_numbers<[1], [1], [0], [0], [0, 0, 1, 0], [], []>} : vector<1x32xf32>, vector<128x32xf32>, vector<1x128xf32> -> vector<1x128xf32>
    %c0_12 = arith.constant 0 : index
    %c0_13 = arith.constant 0 : index
    %18 = vector.load %arg5[%c0_12, %c0_13] : memref<1x1xf32, #tpu.memory_space<vmem>>, vector<1x1xf32>
    %19 = vector.broadcast %18 : vector<1x1xf32> to vector<1x128xf32>
    %20 = arith.addf %17, %19 : vector<1x128xf32>
    %21 = math.absf %20 : vector<1x128xf32>
    %cst_14 = arith.constant 0.000000e+00 : f32
    %22 = vector.broadcast %cst_14 : f32 to vector<1x128xf32>
    %23 = arith.subf %22, %21 : vector<1x128xf32>
    %24 = math.exp %23 : vector<1x128xf32>
    %cst_15 = arith.constant 1.000000e+00 : f32
    %25 = vector.broadcast %cst_15 : f32 to vector<1x128xf32>
    %26 = arith.addf %25, %24 : vector<1x128xf32>
    %27 = tpu.reciprocal %26 {approx = true} : vector<1x128xf32> -> vector<1x128xf32>
    %cst_16 = arith.constant 0.000000e+00 : f32
    %28 = vector.broadcast %cst_16 : f32 to vector<1x128xf32>
    %29 = arith.cmpf oge, %20, %28 : vector<1x128xf32>
    %30 = arith.mulf %24, %27 : vector<1x128xf32>
    %31 = arith.select %29, %27, %30 : vector<1x128xi1>, vector<1x128xf32>
    %cst_17 = arith.constant 1.000000e+00 : f32
    %32 = vector.broadcast %cst_17 : f32 to vector<1x128xf32>
    %33 = arith.subf %32, %31 : vector<1x128xf32>
    %c0_18 = arith.constant 0 : index
    %c0_19 = arith.constant 0 : index
    %34 = vector.load %arg6[%c0_18, %c0_19] : memref<2x128xf32, #tpu.memory_space<vmem>>, vector<1x128xf32>
    tpu.vector_store %arg6[%c0_18, %c0_19], %33 {strides = array<i32>} : memref<2x128xf32, #tpu.memory_space<vmem>>, vector<1x128xf32>,
    %c1 = arith.constant 1 : index
    %c0_20 = arith.constant 0 : index
    %35 = vector.load %arg6[%c1, %c0_20] : memref<2x128xf32, #tpu.memory_space<vmem>>, vector<1x128xf32>
    tpu.vector_store %arg6[%c1, %c0_20], %31 {strides = array<i32>} : memref<2x128xf32, #tpu.memory_space<vmem>>, vector<1x128xf32>,
    return
  }
  func.func @transform_0(%arg0: i32) -> (i32, i32) {
    %c0_i32 = arith.constant 0 : i32
    %c0_i32_0 = arith.constant 0 : i32
    return %arg0, %c0_i32 : i32, i32
  }
  func.func @transform_1(%arg0: i32) -> (i32, i32) {
    %c0_i32 = arith.constant 0 : i32
    %c0_i32_0 = arith.constant 0 : i32
    %c0_i32_1 = arith.constant 0 : i32
    return %c0_i32, %c0_i32_0 : i32, i32
  }
  func.func @transform_2(%arg0: i32) -> (i32, i32) {
    %c0_i32 = arith.constant 0 : i32
    %c0_i32_0 = arith.constant 0 : i32
    %c0_i32_1 = arith.constant 0 : i32
    return %c0_i32, %c0_i32_0 : i32, i32
  }
  func.func @transform_3(%arg0: i32) -> (i32, i32) {
    %c0_i32 = arith.constant 0 : i32
    %c0_i32_0 = arith.constant 0 : i32
    %c0_i32_1 = arith.constant 0 : i32
    return %c0_i32, %c0_i32_0 : i32, i32
  }
  func.func @transform_4(%arg0: i32) -> (i32, i32) {
    %c0_i32 = arith.constant 0 : i32
    %c0_i32_0 = arith.constant 0 : i32
    %c0_i32_1 = arith.constant 0 : i32
    return %c0_i32, %c0_i32_0 : i32, i32
  }
  func.func @transform_5(%arg0: i32) -> (i32, i32) {
    %c0_i32 = arith.constant 0 : i32
    %c0_i32_0 = arith.constant 0 : i32
    return %c0_i32, %arg0 : i32, i32
  }
}

</mosaic_0001>

<llo_original>
// kernel: tpu_custom_call.1
$region0: #{tpu_custom_call.1}
  #allocation0 [shape = 'u32[]', space=smem, size = 0x4, offset = 0x4, fixed_abs, tag = 'smem constant byte address 0x4 - core index']
  #allocation1 [shape = 'u32[144,128]{1,0:T(1,128)}', space=vmem, size = 0x12000, scoped, tag = 'internal scratch']
  #allocation2 [shape = 'f32[1,1]{1,0:T(1,128)S(1)}', space=vmem, size = 0x200, scoped, tag = 'scoped memory for tpu_custom_call.1']
  %s0 = inlined_call_operand.vmem [shape: f32[128,32], index: 0, kind: input, shape index: {}]
  %s1 = inlined_call_operand.vmem [shape: f32[32,32], index: 1, kind: input, shape index: {}]
  %s2 = inlined_call_operand.vmem [shape: f32[1,32], index: 2, kind: input, shape index: {}]
  %s3 = inlined_call_operand.vmem [shape: f32[1,32], index: 3, kind: input, shape index: {}]
  %s4 = inlined_call_operand.<no memory space> [shape: f32[1,1], index: 4, kind: input, shape index: {}]
  %s5 = inlined_call_operand.hbm [shape: f32[2,128], index: 5, kind: output, shape index: {}]
  %s6 = sld [smem:[#allocation0]]
  $region30: #{tpu_custom_call.1} parent=0
    _
  %s8 = ssub.s32 1, %s6
  %s9 = scalar_select 0, %s8, %s6
  %v10 = vstv %s4
  %11 = vst [vmem:[#allocation2] sm:$0x1] %v10
  $region1: #{tpu_custom_call.1} parent=0
    #allocation3 [shape = 'u8[1024]{0}', space=vmem, size = 0x400, scoped, tag = 'output window, operand 0, single buffered']
    #allocation4 [shape = 's32[1]{0}', space=sflag, size = 0x4, scoped, tag = 'scoped memory for tpu_custom_call.1']
    %12 = vsyncpa [#allocation4], 0
    // Predicated region
    $region2: #{tpu_custom_call.1} parent=1 // pred_check
      _
    $region3: #{tpu_custom_call.1} parent=1 // pred_check_branch
      %14 = sbr.rel (0) target = $region5
    $region4: #{tpu_custom_call.1} parent=1 // pred_region
      _
    $region5: #{tpu_custom_call.1} parent=1 // pred_fallthru
      _
    // Predicated region
    $region6: #{tpu_custom_call.1} parent=1 // pred_check
      _
    $region7: #{tpu_custom_call.1} parent=1 // pred_check_branch
      %16 = sbr.rel (0) target = $region9
    $region8: #{tpu_custom_call.1} parent=1 // pred_region
      _
    $region9: #{tpu_custom_call.1} parent=1 // pred_fallthru
      _
    // Predicated region
    $region10: #{tpu_custom_call.1} parent=1 // pred_check
      _
    $region11: #{tpu_custom_call.1} parent=1 // pred_check_branch
      %18 = sbr.rel (0) target = $region13
    $region12: #{tpu_custom_call.1} parent=1 // pred_region
      _
    $region13: #{tpu_custom_call.1} parent=1 // pred_fallthru
      _
    // Predicated region
    $region14: #{tpu_custom_call.1} parent=1 // pred_check
      _
    $region15: #{tpu_custom_call.1} parent=1 // pred_check_branch
      %20 = sbr.rel (0) target = $region17
    $region16: #{tpu_custom_call.1} parent=1 // pred_region
      _
    $region17: #{tpu_custom_call.1} parent=1 // pred_fallthru
      _
    // Predicated region
    $region18: #{tpu_custom_call.1} parent=1 // pred_check
      _
    $region19: #{tpu_custom_call.1} parent=1 // pred_check_branch
      %22 = sbr.rel (0) target = $region21
    $region20: #{tpu_custom_call.1} parent=1 // pred_region
      _
    $region21: #{tpu_custom_call.1} parent=1 // pred_fallthru
      _
    %v23 = vld [vmem:[%s0] sm:$0xff]
    %v24 = vld [vmem:[%s0 + $0x8] sm:$0xff]
    %v25 = vld [vmem:[%s0 + $0x10] sm:$0xff]
    %v26 = vld [vmem:[%s0 + $0x18] sm:$0xff]
    %v27 = vld [vmem:[%s0 + $0x20] sm:$0xff]
    %v28 = vld [vmem:[%s0 + $0x28] sm:$0xff]
    %v29 = vld [vmem:[%s0 + $0x30] sm:$0xff]
    %v30 = vld [vmem:[%s0 + $0x38] sm:$0xff]
    %v31 = vld [vmem:[%s0 + $0x40] sm:$0xff]
    %v32 = vld [vmem:[%s0 + $0x48] sm:$0xff]
    %v33 = vld [vmem:[%s0 + $0x50] sm:$0xff]
    %v34 = vld [vmem:[%s0 + $0x58] sm:$0xff]
    %v35 = vld [vmem:[%s0 + $0x60] sm:$0xff]
    %v36 = vld [vmem:[%s0 + $0x68] sm:$0xff]
    %v37 = vld [vmem:[%s0 + $0x70] sm:$0xff]
    %v38 = vld [vmem:[%s0 + $0x78] sm:$0xff]
    %v39 = vld [vmem:[%s1] sm:$0xff]
    %v40 = vld [vmem:[%s1 + $0x8] sm:$0xff]
    %v41 = vld [vmem:[%s1 + $0x10] sm:$0xff]
    %v42 = vld [vmem:[%s1 + $0x18] sm:$0xff]
    %v43 = vld [vmem:[%s2] sm:$0x1]
    %v45 = vlaneseq
    %v46 = vshrl.u32 %v45, 7
    %v47 = vsub.s32 0, %v46
    %v48 = vrot.slane %v43, %v47
    %vm50 = vcmask 261120
    %v52 = vsel %vm50, %v23, 0
    %v55 = vsel %vm50, %v24, 0
    %v58 = vsel %vm50, %v25, 0
    %v61 = vsel %vm50, %v26, 0
    %v64 = vsel %vm50, %v27, 0
    %v67 = vsel %vm50, %v28, 0
    %v70 = vsel %vm50, %v29, 0
    %v73 = vsel %vm50, %v30, 0
    %v76 = vsel %vm50, %v31, 0
    %v79 = vsel %vm50, %v32, 0
    %v82 = vsel %vm50, %v33, 0
    %v85 = vsel %vm50, %v34, 0
    %v88 = vsel %vm50, %v35, 0
    %v91 = vsel %vm50, %v36, 0
    %v94 = vsel %vm50, %v37, 0
    %v97 = vsel %vm50, %v38, 0
    %99 = vmatprep.subr.mxu0 0.0
    %100 = vmatpush1.msra.mxu0 0.0
    %101 = vmatprep.subr.mxu0 0.0
    %102 = vmatpush1.msra.mxu0 0.0
    %103 = vmatprep.subr.mxu0 0.0
    %104 = vmatpush1.msra.mxu0 0.0
    %105 = vmatprep.subr.mxu0 0.0
    %106 = vmatpush1.msra.mxu0 0.0
    %107 = vmatprep.subr.mxu0 0.0
    %108 = vmatpush1.msra.mxu0 0.0
    %109 = vmatprep.subr.mxu0 0.0
    %110 = vmatpush1.msra.mxu0 0.0
    %111 = vmatprep.subr.mxu0 0.0
    %112 = vmatpush1.msra.mxu0 0.0
    %113 = vmatprep.subr.mxu0 0.0
    %114 = vmatpush1.msra.mxu0 0.0
    %115 = vmatprep.subr.mxu0 0.0
    %116 = vmatpush1.msra.mxu0 0.0
    %117 = vmatprep.subr.mxu0 0.0
    %118 = vmatpush1.msra.mxu0 0.0
    %119 = vmatprep.subr.mxu0 0.0
    %120 = vmatpush1.msra.mxu0 0.0
    %121 = vmatprep.subr.mxu0 0.0
    %122 = vmatpush1.msra.mxu0 0.0
    %123 = vmatprep.subr.mxu0 0.0
    %124 = vmatpush1.msra.mxu0 %v42
    %125 = vmatprep.subr.mxu0 0.0
    %126 = vmatpush1.msra.mxu0 %v41
    %127 = vmatprep.subr.mxu0 0.0
    %128 = vmatpush1.msra.mxu0 %v40
    %129 = vmatprep.subr.mxu0 0.0
    %130 = vmatpush1.msra.mxu0 %v39
    %131 = vmatprep.subr.mxu0 0.0
    %132 = vmatpush2.msra.mxu0 0.0
    %133 = vmatprep.subr.mxu0 0.0
    %134 = vmatpush2.msra.mxu0 0.0
    %135 = vmatprep.subr.mxu0 0.0
    %136 = vmatpush2.msra.mxu0 0.0
    %137 = vmatprep.subr.mxu0 0.0
    %138 = vmatpush2.msra.mxu0 0.0
    %139 = vmatprep.subr.mxu0 0.0
    %140 = vmatpush2.msra.mxu0 0.0
    %141 = vmatprep.subr.mxu0 0.0
    %142 = vmatpush2.msra.mxu0 0.0
    %143 = vmatprep.subr.mxu0 0.0
    %144 = vmatpush2.msra.mxu0 0.0
    %145 = vmatprep.subr.mxu0 0.0
    %146 = vmatpush2.msra.mxu0 0.0
    %147 = vmatprep.subr.mxu0 0.0
    %148 = vmatpush2.msra.mxu0 0.0
    %149 = vmatprep.subr.mxu0 0.0
    %150 = vmatpush2.msra.mxu0 0.0
    %151 = vmatprep.subr.mxu0 0.0
    %152 = vmatpush2.msra.mxu0 0.0
    %153 = vmatprep.subr.mxu0 0.0
    %154 = vmatpush2.msra.mxu0 0.0
    %155 = vmatprep.subr.mxu0 0.0
    %156 = vmatpush2.msra.mxu0 0.0
    %157 = vmatprep.subr.mxu0 0.0
    %158 = vmatpush2.msra.mxu0 0.0
    %159 = vmatprep.subr.mxu0 0.0
    %160 = vmatpush2.msra.mxu0 0.0
    %161 = vmatprep.subr.mxu0 0.0
    %162 = vmatpush2.msra.mxu0 0.0
    %163 = vmatprep.mubr.f32.mxu0 0.0
    %164 = vmatmul.mubr.f32.gmra.mxu0 %v52
    %v165 = vpop.f32.mrf.mxu0
    %v166 = vadd.f32 %v48, %v165
    %v167 = vpop.f32.mrf.mxu0
    %168 = vmatprep.mubr.f32.mxu0 0.0
    %169 = vmatmul.mubr.f32.gmra.mxu0 %v55
    %v170 = vpop.f32.mrf.mxu0
    %v171 = vadd.f32 %v48, %v170
    %v172 = vpop.f32.mrf.mxu0
    %173 = vmatprep.mubr.f32.mxu0 0.0
    %174 = vmatmul.mubr.f32.gmra.mxu0 %v58
    %v175 = vpop.f32.mrf.mxu0
    %v176 = vadd.f32 %v48, %v175
    %v177 = vpop.f32.mrf.mxu0
    %178 = vmatprep.mubr.f32.mxu0 0.0
    %179 = vmatmul.mubr.f32.gmra.mxu0 %v61
    %v180 = vpop.f32.mrf.mxu0
    %v181 = vadd.f32 %v48, %v180
    %v182 = vpop.f32.mrf.mxu0
    %183 = vmatprep.mubr.f32.mxu0 0.0
    %184 = vmatmul.mubr.f32.gmra.mxu0 %v64
    %v185 = vpop.f32.mrf.mxu0
    %v186 = vadd.f32 %v48, %v185
    %v187 = vpop.f32.mrf.mxu0
    %188 = vmatprep.mubr.f32.mxu0 0.0
    %189 = vmatmul.mubr.f32.gmra.mxu0 %v67
    %v190 = vpop.f32.mrf.mxu0
    %v191 = vadd.f32 %v48, %v190
    %v192 = vpop.f32.mrf.mxu0
    %193 = vmatprep.mubr.f32.mxu0 0.0
    %194 = vmatmul.mubr.f32.gmra.mxu0 %v70
    %v195 = vpop.f32.mrf.mxu0
    %v196 = vadd.f32 %v48, %v195
    %v197 = vpop.f32.mrf.mxu0
    %198 = vmatprep.mubr.f32.mxu0 0.0
    %199 = vmatmul.mubr.f32.gmra.mxu0 %v73
    %v200 = vpop.f32.mrf.mxu0
    %v201 = vadd.f32 %v48, %v200
    %v202 = vpop.f32.mrf.mxu0
    %203 = vmatprep.mubr.f32.mxu0 0.0
    %204 = vmatmul.mubr.f32.gmra.mxu0 %v76
    %v205 = vpop.f32.mrf.mxu0
    %v206 = vadd.f32 %v48, %v205
    %v207 = vpop.f32.mrf.mxu0
    %208 = vmatprep.mubr.f32.mxu0 0.0
    %209 = vmatmul.mubr.f32.gmra.mxu0 %v79
    %v210 = vpop.f32.mrf.mxu0
    %v211 = vadd.f32 %v48, %v210
    %v212 = vpop.f32.mrf.mxu0
    %213 = vmatprep.mubr.f32.mxu0 0.0
    %214 = vmatmul.mubr.f32.gmra.mxu0 %v82
    %v215 = vpop.f32.mrf.mxu0
    %v216 = vadd.f32 %v48, %v215
    %v217 = vpop.f32.mrf.mxu0
    %218 = vmatprep.mubr.f32.mxu0 0.0
    %219 = vmatmul.mubr.f32.gmra.mxu0 %v85
    %v220 = vpop.f32.mrf.mxu0
    %v221 = vadd.f32 %v48, %v220
    %v222 = vpop.f32.mrf.mxu0
    %223 = vmatprep.mubr.f32.mxu0 0.0
    %224 = vmatmul.mubr.f32.gmra.mxu0 %v88
    %v225 = vpop.f32.mrf.mxu0
    %v226 = vadd.f32 %v48, %v225
    %v227 = vpop.f32.mrf.mxu0
    %228 = vmatprep.mubr.f32.mxu0 0.0
    %229 = vmatmul.mubr.f32.gmra.mxu0 %v91
    %v230 = vpop.f32.mrf.mxu0
    %v231 = vadd.f32 %v48, %v230
    %v232 = vpop.f32.mrf.mxu0
    %233 = vmatprep.mubr.f32.mxu0 0.0
    %234 = vmatmul.mubr.f32.gmra.mxu0 %v94
    %v235 = vpop.f32.mrf.mxu0
    %v236 = vadd.f32 %v48, %v235
    %v237 = vpop.f32.mrf.mxu0
    %238 = vmatprep.mubr.f32.mxu0 0.0
    %239 = vmatmul.mubr.f32.gmra.mxu0 %v97
    %v240 = vpop.f32.mrf.mxu0
    %v241 = vadd.f32 %v48, %v240
    %v242 = vpop.f32.mrf.mxu0
    %243 = vdwg.mxu0
    %vm244 = vcmp.gt.f32.partialorder %v166, 0.0
    %vm245 = vcmp.gt.f32.partialorder %v171, 0.0
    %vm246 = vcmp.gt.f32.partialorder %v176, 0.0
    %vm247 = vcmp.gt.f32.partialorder %v181, 0.0
    %vm248 = vcmp.gt.f32.partialorder %v186, 0.0
    %vm249 = vcmp.gt.f32.partialorder %v191, 0.0
    %vm250 = vcmp.gt.f32.partialorder %v196, 0.0
    %vm251 = vcmp.gt.f32.partialorder %v201, 0.0
    %vm252 = vcmp.gt.f32.partialorder %v206, 0.0
    %vm253 = vcmp.gt.f32.partialorder %v211, 0.0
    %vm254 = vcmp.gt.f32.partialorder %v216, 0.0
    %vm255 = vcmp.gt.f32.partialorder %v221, 0.0
    %vm256 = vcmp.gt.f32.partialorder %v226, 0.0
    %vm257 = vcmp.gt.f32.partialorder %v231, 0.0
    %vm258 = vcmp.gt.f32.partialorder %v236, 0.0
    %vm259 = vcmp.gt.f32.partialorder %v241, 0.0
    %v260 = vmul.f32 %v166, 1.442695
    %v261 = vpow.pop %v260
    %v262 = vmul.f32 %v171, 1.442695
    %v263 = vpow.pop %v262
    %v264 = vmul.f32 %v176, 1.442695
    %v265 = vpow.pop %v264
    %v266 = vmul.f32 %v181, 1.442695
    %v267 = vpow.pop %v266
    %v268 = vmul.f32 %v186, 1.442695
    %v269 = vpow.pop %v268
    %v270 = vmul.f32 %v191, 1.442695
    %v271 = vpow.pop %v270
    %v272 = vmul.f32 %v196, 1.442695
    %v273 = vpow.pop %v272
    %v274 = vmul.f32 %v201, 1.442695
    %v275 = vpow.pop %v274
    %v276 = vmul.f32 %v206, 1.442695
    %v277 = vpow.pop %v276
    %v278 = vmul.f32 %v211, 1.442695
    %v279 = vpow.pop %v278
    %v280 = vmul.f32 %v216, 1.442695
    %v281 = vpow.pop %v280
    %v282 = vmul.f32 %v221, 1.442695
    %v283 = vpow.pop %v282
    %v284 = vmul.f32 %v226, 1.442695
    %v285 = vpow.pop %v284
    %v286 = vmul.f32 %v231, 1.442695
    %v287 = vpow.pop %v286
    %v288 = vmul.f32 %v236, 1.442695
    %v289 = vpow.pop %v288
    %v290 = vmul.f32 %v241, 1.442695
    %v291 = vpow.pop %v290
    %v292 = vsub.f32 %v261, 1.0
    %v293 = vsub.f32 %v263, 1.0
    %v294 = vsub.f32 %v265, 1.0
    %v295 = vsub.f32 %v267, 1.0
    %v296 = vsub.f32 %v269, 1.0
    %v297 = vsub.f32 %v271, 1.0
    %v298 = vsub.f32 %v273, 1.0
    %v299 = vsub.f32 %v275, 1.0
    %v300 = vsub.f32 %v277, 1.0
    %v301 = vsub.f32 %v279, 1.0
    %v302 = vsub.f32 %v281, 1.0
    %v303 = vsub.f32 %v283, 1.0
    %v304 = vsub.f32 %v285, 1.0
    %v305 = vsub.f32 %v287, 1.0
    %v306 = vsub.f32 %v289, 1.0
    %v307 = vsub.f32 %v291, 1.0
    %v308 = vmul.f32 %v292, 1.6732632
    %v309 = vmul.f32 %v293, 1.6732632
    %v310 = vmul.f32 %v294, 1.6732632
    %v311 = vmul.f32 %v295, 1.6732632
    %v312 = vmul.f32 %v296, 1.6732632
    %v313 = vmul.f32 %v297, 1.6732632
    %v314 = vmul.f32 %v298, 1.6732632
    %v315 = vmul.f32 %v299, 1.6732632
    %v316 = vmul.f32 %v300, 1.6732632
    %v317 = vmul.f32 %v301, 1.6732632
    %v318 = vmul.f32 %v302, 1.6732632
    %v319 = vmul.f32 %v303, 1.6732632
    %v320 = vmul.f32 %v304, 1.6732632
    %v321 = vmul.f32 %v305, 1.6732632
    %v322 = vmul.f32 %v306, 1.6732632
    %v323 = vmul.f32 %v307, 1.6732632
    %v324 = vsel %vm244, %v166, %v308
    %v325 = vsel %vm245, %v171, %v309
    %v326 = vsel %vm246, %v176, %v310
    %v327 = vsel %vm247, %v181, %v311
    %v328 = vsel %vm248, %v186, %v312
    %v329 = vsel %vm249, %v191, %v313
    %v330 = vsel %vm250, %v196, %v314
    %v331 = vsel %vm251, %v201, %v315
    %v332 = vsel %vm252, %v206, %v316
    %v333 = vsel %vm253, %v211, %v317
    %v334 = vsel %vm254, %v216, %v318
    %v335 = vsel %vm255, %v221, %v319
    %v336 = vsel %vm256, %v226, %v320
    %v337 = vsel %vm257, %v231, %v321
    %v338 = vsel %vm258, %v236, %v322
    %v339 = vsel %vm259, %v241, %v323
    %v340 = vmul.f32 %v324, 1.050701
    %v341 = vmul.f32 %v325, 1.050701
    %v342 = vmul.f32 %v326, 1.050701
    %v343 = vmul.f32 %v327, 1.050701
    %v344 = vmul.f32 %v328, 1.050701
    %v345 = vmul.f32 %v329, 1.050701
    %v346 = vmul.f32 %v330, 1.050701
    %v347 = vmul.f32 %v331, 1.050701
    %v348 = vmul.f32 %v332, 1.050701
    %v349 = vmul.f32 %v333, 1.050701
    %v350 = vmul.f32 %v334, 1.050701
    %v351 = vmul.f32 %v335, 1.050701
    %v352 = vmul.f32 %v336, 1.050701
    %v353 = vmul.f32 %v337, 1.050701
    %v354 = vmul.f32 %v338, 1.050701
    %v355 = vmul.f32 %v339, 1.050701
    %v356 = vld [vmem:[%s3] sm:$0x1]
    %v357 = vld [vmem:[#allocation2] sm:$0x1]
    %359 = vset.pattern.permute.xlu0 0
    %360 = vperm.xlu0 %359, %v357
    %v361 = vpop.permute.xlu0 %360
    %v363 = vlaneseq
    %v364 = vshrl.u32 %v363, 7
    %v365 = vsub.s32 0, %v364
    %v366 = vrot.slane %v361, %v365
    %v368 = vsel %vm50, %v356, 0
    %v371 = vsel %vm50, %v340, 0
    %v374 = vsel %vm50, %v341, 0
    %v377 = vsel %vm50, %v342, 0
    %v380 = vsel %vm50, %v343, 0
    %v383 = vsel %vm50, %v344, 0
    %v386 = vsel %vm50, %v345, 0
    %v389 = vsel %vm50, %v346, 0
    %v392 = vsel %vm50, %v347, 0
    %v395 = vsel %vm50, %v348, 0
    %v398 = vsel %vm50, %v349, 0
    %v401 = vsel %vm50, %v350, 0
    %v404 = vsel %vm50, %v351, 0
    %v407 = vsel %vm50, %v352, 0
    %v410 = vsel %vm50, %v353, 0
    %v413 = vsel %vm50, %v354, 0
    %v416 = vsel %vm50, %v355, 0
    %418 = vmatprep.subr.mxu0 0.0
    %419 = vmatpush1.xpose.msra.mxu0 %v416
    %420 = vmatprep.subr.mxu0 0.0
    %421 = vmatpush1.xpose.msra.mxu0 %v413
    %422 = vmatprep.subr.mxu0 0.0
    %423 = vmatpush1.xpose.msra.mxu0 %v410
    %424 = vmatprep.subr.mxu0 0.0
    %425 = vmatpush1.xpose.msra.mxu0 %v407
    %426 = vmatprep.subr.mxu0 0.0
    %427 = vmatpush1.xpose.msra.mxu0 %v404
    %428 = vmatprep.subr.mxu0 0.0
    %429 = vmatpush1.xpose.msra.mxu0 %v401
    %430 = vmatprep.subr.mxu0 0.0
    %431 = vmatpush1.xpose.msra.mxu0 %v398
    %432 = vmatprep.subr.mxu0 0.0
    %433 = vmatpush1.xpose.msra.mxu0 %v395
    %434 = vmatprep.subr.mxu0 0.0
    %435 = vmatpush1.xpose.msra.mxu0 %v392
    %436 = vmatprep.subr.mxu0 0.0
    %437 = vmatpush1.xpose.msra.mxu0 %v389
    %438 = vmatprep.subr.mxu0 0.0
    %439 = vmatpush1.xpose.msra.mxu0 %v386
    %440 = vmatprep.subr.mxu0 0.0
    %441 = vmatpush1.xpose.msra.mxu0 %v383
    %442 = vmatprep.subr.mxu0 0.0
    %443 = vmatpush1.xpose.msra.mxu0 %v380
    %444 = vmatprep.subr.mxu0 0.0
    %445 = vmatpush1.xpose.msra.mxu0 %v377
    %446 = vmatprep.subr.mxu0 0.0
    %447 = vmatpush1.xpose.msra.mxu0 %v374
    %448 = vmatprep.subr.mxu0 0.0
    %449 = vmatpush1.xpose.msra.mxu0 %v371
    %450 = vmatprep.subr.mxu0 0.0
    %451 = vmatpush2.xpose.msra.mxu0 0.0
    %452 = vmatprep.subr.mxu0 0.0
    %453 = vmatpush2.xpose.msra.mxu0 0.0
    %454 = vmatprep.subr.mxu0 0.0
    %455 = vmatpush2.xpose.msra.mxu0 0.0
    %456 = vmatprep.subr.mxu0 0.0
    %457 = vmatpush2.xpose.msra.mxu0 0.0
    %458 = vmatprep.subr.mxu0 0.0
    %459 = vmatpush2.xpose.msra.mxu0 0.0
    %460 = vmatprep.subr.mxu0 0.0
    %461 = vmatpush2.xpose.msra.mxu0 0.0
    %462 = vmatprep.subr.mxu0 0.0
    %463 = vmatpush2.xpose.msra.mxu0 0.0
    %464 = vmatprep.subr.mxu0 0.0
    %465 = vmatpush2.xpose.msra.mxu0 0.0
    %466 = vmatprep.subr.mxu0 0.0
    %467 = vmatpush2.xpose.msra.mxu0 0.0
    %468 = vmatprep.subr.mxu0 0.0
    %469 = vmatpush2.xpose.msra.mxu0 0.0
    %470 = vmatprep.subr.mxu0 0.0
    %471 = vmatpush2.xpose.msra.mxu0 0.0
    %472 = vmatprep.subr.mxu0 0.0
    %473 = vmatpush2.xpose.msra.mxu0 0.0
    %474 = vmatprep.subr.mxu0 0.0
    %475 = vmatpush2.xpose.msra.mxu0 0.0
    %476 = vmatprep.subr.mxu0 0.0
    %477 = vmatpush2.xpose.msra.mxu0 0.0
    %478 = vmatprep.subr.mxu0 0.0
    %479 = vmatpush2.xpose.msra.mxu0 0.0
    %480 = vmatprep.subr.mxu0 0.0
    %481 = vmatpush2.xpose.msra.mxu0 0.0
    %482 = vmatprep.mubr.f32.mxu0 0.0
    %483 = vmatmul.mubr.f32.gmra.mxu0 %v368
    %v484 = vpop.f32.mrf.mxu0
    %v485 = vadd.f32 %v366, %v484
    %v486 = vpop.f32.mrf.mxu0
    %487 = vdwg.mxu0
    %v488 = vand.u32 2147483647, %v485
    %v489 = vsub.f32 0.0, %v488
    %v490 = vmul.f32 %v489, 1.442695
    %v491 = vpow.pop %v490
    %v492 = vadd.f32 %v491, 1.0
    %v493 = vrcp.pop %v492
    %vm494 = vcmp.ge.f32.partialorder %v485, 0.0
    %v495 = vmul.f32 %v491, %v493
    %v496 = vsel %vm494, %v493, %v495
    %v497 = vsub.f32 1.0, %v496
    %498 = vst [vmem:[#allocation3] sm:$0x1] %v497
    %499 = vst [vmem:[#allocation3 + $0x1] sm:$0x1] %v496
    // Predicated region
    $region22: #{tpu_custom_call.1} parent=1 // pred_check
      _
    $region23: #{tpu_custom_call.1} parent=1 // pred_check_branch
      %501 = sbr.rel (0) target = $region25
    $region24: #{tpu_custom_call.1} parent=1 // pred_region
      %s503 = ssub.s32 32, 32
      %504 = vsyncadd [#allocation4], %s503
      %s506 = sshll.u32 [#allocation3], 4
      %s507 = int_to_ptr.vmem [resolvable:$true] %s506
      %509 = dma.vmem_to_hbm [thread:$0]  %s507, 32, %s5, [#allocation4]
    $region25: #{tpu_custom_call.1} parent=1 // pred_fallthru
      _
    // Predicated region
    $region26: #{tpu_custom_call.1} parent=1 // pred_check
      _
    $region27: #{tpu_custom_call.1} parent=1 // pred_check_branch
      %511 = sbr.rel (0) target = $region29
    $region28: #{tpu_custom_call.1} parent=1 // pred_region
      %512 = dma.done [#allocation4], 32
    $region29: #{tpu_custom_call.1} parent=1 // pred_fallthru
      _
    %513 = vsyncpa [#allocation4], 1

// kernel: tpu_custom_call.1
$region0: #{tpu_custom_call.1}
  #allocation0 [shape = 'u32[]', space=smem, size = 0x4, offset = 0x4, fixed_abs, tag = 'smem constant byte address 0x4 - core index']
  #allocation1 [shape = 'u32[144,128]{1,0:T(1,128)}', space=vmem, size = 0x12000, scoped, tag = 'internal scratch']
  #allocation2 [shape = 'f32[1,1]{1,0:T(1,128)S(1)}', space=vmem, size = 0x200, scoped, tag = 'scoped memory for tpu_custom_call.1']
  %s0 = inlined_call_operand.vmem [shape: f32[128,32], index: 0, kind: input, shape index: {}]
  %s1 = inlined_call_operand.vmem [shape: f32[32,32], index: 1, kind: input, shape index: {}]
  %s2 = inlined_call_operand.vmem [shape: f32[1,32], index: 2, kind: input, shape index: {}]
  %s3 = inlined_call_operand.vmem [shape: f32[1,32], index: 3, kind: input, shape index: {}]
  %s4 = inlined_call_operand.<no memory space> [shape: f32[1,1], index: 4, kind: input, shape index: {}]
  %s5 = inlined_call_operand.hbm [shape: f32[2,128], index: 5, kind: output, shape index: {}]
  %s6 = sld [smem:[#allocation0]]
  $region30: #{tpu_custom_call.1} parent=0
    _
  %s8 = ssub.s32 1, %s6
  %s9 = scalar_select 0, %s8, %s6
  %v10 = vstv %s4
  %11 = vst [vmem:[#allocation2] sm:$0x1] %v10
  $region1: #{tpu_custom_call.1} parent=0
    #allocation3 [shape = 'u8[1024]{0}', space=vmem, size = 0x400, scoped, tag = 'output window, operand 0, single buffered']
    #allocation4 [shape = 's32[1]{0}', space=sflag, size = 0x4, scoped, tag = 'scoped memory for tpu_custom_call.1']
    %12 = vsyncpa [#allocation4], 0
    // Predicated region
    $region2: #{tpu_custom_call.1} parent=1 // pred_check
      _
    $region3: #{tpu_custom_call.1} parent=1 // pred_check_branch
      %14 = sbr.rel (0) target = $region5
    $region4: #{tpu_custom_call.1} parent=1 // pred_region
      _
    $region5: #{tpu_custom_call.1} parent=1 // pred_fallthru
      _
    // Predicated region
    $region6: #{tpu_custom_call.1} parent=1 // pred_check
      _
    $region7: #{tpu_custom_call.1} parent=1 // pred_check_branch
      %16 = sbr.rel (0) target = $region9
    $region8: #{tpu_custom_call.1} parent=1 // pred_region
      _
    $region9: #{tpu_custom_call.1} parent=1 // pred_fallthru
      _
    // Predicated region
    $region10: #{tpu_custom_call.1} parent=1 // pred_check
      _
    $region11: #{tpu_custom_call.1} parent=1 // pred_check_branch
      %18 = sbr.rel (0) target = $region13
    $region12: #{tpu_custom_call.1} parent=1 // pred_region
      _
    $region13: #{tpu_custom_call.1} parent=1 // pred_fallthru
      _
    // Predicated region
    $region14: #{tpu_custom_call.1} parent=1 // pred_check
      _
    $region15: #{tpu_custom_call.1} parent=1 // pred_check_branch
      %20 = sbr.rel (0) target = $region17
    $region16: #{tpu_custom_call.1} parent=1 // pred_region
      _
    $region17: #{tpu_custom_call.1} parent=1 // pred_fallthru
      _
    // Predicated region
    $region18: #{tpu_custom_call.1} parent=1 // pred_check
      _
    $region19: #{tpu_custom_call.1} parent=1 // pred_check_branch
      %22 = sbr.rel (0) target = $region21
    $region20: #{tpu_custom_call.1} parent=1 // pred_region
      _
    $region21: #{tpu_custom_call.1} parent=1 // pred_fallthru
      _
    %v23 = vld [vmem:[%s0] sm:$0xff]
    %v24 = vld [vmem:[%s0 + $0x8] sm:$0xff]
    %v25 = vld [vmem:[%s0 + $0x10] sm:$0xff]
    %v26 = vld [vmem:[%s0 + $0x18] sm:$0xff]
    %v27 = vld [vmem:[%s0 + $0x20] sm:$0xff]
    %v28 = vld [vmem:[%s0 + $0x28] sm:$0xff]
    %v29 = vld [vmem:[%s0 + $0x30] sm:$0xff]
    %v30 = vld [vmem:[%s0 + $0x38] sm:$0xff]
    %v31 = vld [vmem:[%s0 + $0x40] sm:$0xff]
    %v32 = vld [vmem:[%s0 + $0x48] sm:$0xff]
    %v33 = vld [vmem:[%s0 + $0x50] sm:$0xff]
    %v34 = vld [vmem:[%s0 + $0x58] sm:$0xff]
    %v35 = vld [vmem:[%s0 + $0x60] sm:$0xff]
    %v36 = vld [vmem:[%s0 + $0x68] sm:$0xff]
    %v37 = vld [vmem:[%s0 + $0x70] sm:$0xff]
    %v38 = vld [vmem:[%s0 + $0x78] sm:$0xff]
    %v39 = vld [vmem:[%s1] sm:$0xff]
    %v40 = vld [vmem:[%s1 + $0x8] sm:$0xff]
    %v41 = vld [vmem:[%s1 + $0x10] sm:$0xff]
    %v42 = vld [vmem:[%s1 + $0x18] sm:$0xff]
    %v43 = vld [vmem:[%s2] sm:$0x1]
    %v45 = vlaneseq
    %v46 = vshrl.u32 %v45, 7
    %v47 = vsub.s32 0, %v46
    %v48 = vrot.slane %v43, %v47
    %vm50 = vcmask 261120
    %v52 = vsel %vm50, %v23, 0
    %v55 = vsel %vm50, %v24, 0
    %v58 = vsel %vm50, %v25, 0
    %v61 = vsel %vm50, %v26, 0
    %v64 = vsel %vm50, %v27, 0
    %v67 = vsel %vm50, %v28, 0
    %v70 = vsel %vm50, %v29, 0
    %v73 = vsel %vm50, %v30, 0
    %v76 = vsel %vm50, %v31, 0
    %v79 = vsel %vm50, %v32, 0
    %v82 = vsel %vm50, %v33, 0
    %v85 = vsel %vm50, %v34, 0
    %v88 = vsel %vm50, %v35, 0
    %v91 = vsel %vm50, %v36, 0
    %v94 = vsel %vm50, %v37, 0
    %v97 = vsel %vm50, %v38, 0
    %99 = vmatprep.subr.mxu0 0.0
    %100 = vmatpush1.msra.mxu0 0.0
    %101 = vmatprep.subr.mxu0 0.0
    %102 = vmatpush1.msra.mxu0 0.0
    %103 = vmatprep.subr.mxu0 0.0
    %104 = vmatpush1.msra.mxu0 0.0
    %105 = vmatprep.subr.mxu0 0.0
    %106 = vmatpush1.msra.mxu0 0.0
    %107 = vmatprep.subr.mxu0 0.0
    %108 = vmatpush1.msra.mxu0 0.0
    %109 = vmatprep.subr.mxu0 0.0
    %110 = vmatpush1.msra.mxu0 0.0
    %111 = vmatprep.subr.mxu0 0.0
    %112 = vmatpush1.msra.mxu0 0.0
    %113 = vmatprep.subr.mxu0 0.0
    %114 = vmatpush1.msra.mxu0 0.0
    %115 = vmatprep.subr.mxu0 0.0
    %116 = vmatpush1.msra.mxu0 0.0
    %117 = vmatprep.subr.mxu0 0.0
    %118 = vmatpush1.msra.mxu0 0.0
    %119 = vmatprep.subr.mxu0 0.0
    %120 = vmatpush1.msra.mxu0 0.0
    %121 = vmatprep.subr.mxu0 0.0
    %122 = vmatpush1.msra.mxu0 0.0
    %123 = vmatprep.subr.mxu0 0.0
    %124 = vmatpush1.msra.mxu0 %v42
    %125 = vmatprep.subr.mxu0 0.0
    %126 = vmatpush1.msra.mxu0 %v41
    %127 = vmatprep.subr.mxu0 0.0
    %128 = vmatpush1.msra.mxu0 %v40
    %129 = vmatprep.subr.mxu0 0.0
    %130 = vmatpush1.msra.mxu0 %v39
    %131 = vmatprep.subr.mxu0 0.0
    %132 = vmatpush2.msra.mxu0 0.0
    %133 = vmatprep.subr.mxu0 0.0
    %134 = vmatpush2.msra.mxu0 0.0
    %135 = vmatprep.subr.mxu0 0.0
    %136 = vmatpush2.msra.mxu0 0.0
    %137 = vmatprep.subr.mxu0 0.0
    %138 = vmatpush2.msra.mxu0 0.0
    %139 = vmatprep.subr.mxu0 0.0
    %140 = vmatpush2.msra.mxu0 0.0
    %141 = vmatprep.subr.mxu0 0.0
    %142 = vmatpush2.msra.mxu0 0.0
    %143 = vmatprep.subr.mxu0 0.0
    %144 = vmatpush2.msra.mxu0 0.0
    %145 = vmatprep.subr.mxu0 0.0
    %146 = vmatpush2.msra.mxu0 0.0
    %147 = vmatprep.subr.mxu0 0.0
    %148 = vmatpush2.msra.mxu0 0.0
    %149 = vmatprep.subr.mxu0 0.0
    %150 = vmatpush2.msra.mxu0 0.0
    %151 = vmatprep.subr.mxu0 0.0
    %152 = vmatpush2.msra.mxu0 0.0
    %153 = vmatprep.subr.mxu0 0.0
    %154 = vmatpush2.msra.mxu0 0.0
    %155 = vmatprep.subr.mxu0 0.0
    %156 = vmatpush2.msra.mxu0 0.0
    %157 = vmatprep.subr.mxu0 0.0
    %158 = vmatpush2.msra.mxu0 0.0
    %159 = vmatprep.subr.mxu0 0.0
    %160 = vmatpush2.msra.mxu0 0.0
    %161 = vmatprep.subr.mxu0 0.0
    %162 = vmatpush2.msra.mxu0 0.0
    %163 = vmatprep.mubr.f32.mxu0 0.0
    %164 = vmatmul.mubr.f32.gmra.mxu0 %v52
    %v165 = vpop.f32.mrf.mxu0
    %v166 = vadd.f32 %v48, %v165
    %v167 = vpop.f32.mrf.mxu0
    %168 = vmatprep.mubr.f32.mxu0 0.0
    %169 = vmatmul.mubr.f32.gmra.mxu0 %v55
    %v170 = vpop.f32.mrf.mxu0
    %v171 = vadd.f32 %v48, %v170
    %v172 = vpop.f32.mrf.mxu0
    %173 = vmatprep.mubr.f32.mxu0 0.0
    %174 = vmatmul.mubr.f32.gmra.mxu0 %v58
    %v175 = vpop.f32.mrf.mxu0
    %v176 = vadd.f32 %v48, %v175
    %v177 = vpop.f32.mrf.mxu0
    %178 = vmatprep.mubr.f32.mxu0 0.0
    %179 = vmatmul.mubr.f32.gmra.mxu0 %v61
    %v180 = vpop.f32.mrf.mxu0
    %v181 = vadd.f32 %v48, %v180
    %v182 = vpop.f32.mrf.mxu0
    %183 = vmatprep.mubr.f32.mxu0 0.0
    %184 = vmatmul.mubr.f32.gmra.mxu0 %v64
    %v185 = vpop.f32.mrf.mxu0
    %v186 = vadd.f32 %v48, %v185
    %v187 = vpop.f32.mrf.mxu0
    %188 = vmatprep.mubr.f32.mxu0 0.0
    %189 = vmatmul.mubr.f32.gmra.mxu0 %v67
    %v190 = vpop.f32.mrf.mxu0
    %v191 = vadd.f32 %v48, %v190
    %v192 = vpop.f32.mrf.mxu0
    %193 = vmatprep.mubr.f32.mxu0 0.0
    %194 = vmatmul.mubr.f32.gmra.mxu0 %v70
    %v195 = vpop.f32.mrf.mxu0
    %v196 = vadd.f32 %v48, %v195
    %v197 = vpop.f32.mrf.mxu0
    %198 = vmatprep.mubr.f32.mxu0 0.0
    %199 = vmatmul.mubr.f32.gmra.mxu0 %v73
    %v200 = vpop.f32.mrf.mxu0
    %v201 = vadd.f32 %v48, %v200
    %v202 = vpop.f32.mrf.mxu0
    %203 = vmatprep.mubr.f32.mxu0 0.0
    %204 = vmatmul.mubr.f32.gmra.mxu0 %v76
    %v205 = vpop.f32.mrf.mxu0
    %v206 = vadd.f32 %v48, %v205
    %v207 = vpop.f32.mrf.mxu0
    %208 = vmatprep.mubr.f32.mxu0 0.0
    %209 = vmatmul.mubr.f32.gmra.mxu0 %v79
    %v210 = vpop.f32.mrf.mxu0
    %v211 = vadd.f32 %v48, %v210
    %v212 = vpop.f32.mrf.mxu0
    %213 = vmatprep.mubr.f32.mxu0 0.0
    %214 = vmatmul.mubr.f32.gmra.mxu0 %v82
    %v215 = vpop.f32.mrf.mxu0
    %v216 = vadd.f32 %v48, %v215
    %v217 = vpop.f32.mrf.mxu0
    %218 = vmatprep.mubr.f32.mxu0 0.0
    %219 = vmatmul.mubr.f32.gmra.mxu0 %v85
    %v220 = vpop.f32.mrf.mxu0
    %v221 = vadd.f32 %v48, %v220
    %v222 = vpop.f32.mrf.mxu0
    %223 = vmatprep.mubr.f32.mxu0 0.0
    %224 = vmatmul.mubr.f32.gmra.mxu0 %v88
    %v225 = vpop.f32.mrf.mxu0
    %v226 = vadd.f32 %v48, %v225
    %v227 = vpop.f32.mrf.mxu0
    %228 = vmatprep.mubr.f32.mxu0 0.0
    %229 = vmatmul.mubr.f32.gmra.mxu0 %v91
    %v230 = vpop.f32.mrf.mxu0
    %v231 = vadd.f32 %v48, %v230
    %v232 = vpop.f32.mrf.mxu0
    %233 = vmatprep.mubr.f32.mxu0 0.0
    %234 = vmatmul.mubr.f32.gmra.mxu0 %v94
    %v235 = vpop.f32.mrf.mxu0
    %v236 = vadd.f32 %v48, %v235
    %v237 = vpop.f32.mrf.mxu0
    %238 = vmatprep.mubr.f32.mxu0 0.0
    %239 = vmatmul.mubr.f32.gmra.mxu0 %v97
    %v240 = vpop.f32.mrf.mxu0
    %v241 = vadd.f32 %v48, %v240
    %v242 = vpop.f32.mrf.mxu0
    %243 = vdwg.mxu0
    %vm244 = vcmp.gt.f32.partialorder %v166, 0.0
    %vm245 = vcmp.gt.f32.partialorder %v171, 0.0
    %vm246 = vcmp.gt.f32.partialorder %v176, 0.0
    %vm247 = vcmp.gt.f32.partialorder %v181, 0.0
    %vm248 = vcmp.gt.f32.partialorder %v186, 0.0
    %vm249 = vcmp.gt.f32.partialorder %v191, 0.0
    %vm250 = vcmp.gt.f32.partialorder %v196, 0.0
    %vm251 = vcmp.gt.f32.partialorder %v201, 0.0
    %vm252 = vcmp.gt.f32.partialorder %v206, 0.0
    %vm253 = vcmp.gt.f32.partialorder %v211, 0.0
    %vm254 = vcmp.gt.f32.partialorder %v216, 0.0
    %vm255 = vcmp.gt.f32.partialorder %v221, 0.0
    %vm256 = vcmp.gt.f32.partialorder %v226, 0.0
    %vm257 = vcmp.gt.f32.partialorder %v231, 0.0
    %vm258 = vcmp.gt.f32.partialorder %v236, 0.0
    %vm259 = vcmp.gt.f32.partialorder %v241, 0.0
    %v260 = vmul.f32 %v166, 1.442695
    %v261 = vpow.pop %v260
    %v262 = vmul.f32 %v171, 1.442695
    %v263 = vpow.pop %v262
    %v264 = vmul.f32 %v176, 1.442695
    %v265 = vpow.pop %v264
    %v266 = vmul.f32 %v181, 1.442695
    %v267 = vpow.pop %v266
    %v268 = vmul.f32 %v186, 1.442695
    %v269 = vpow.pop %v268
    %v270 = vmul.f32 %v191, 1.442695
    %v271 = vpow.pop %v270
    %v272 = vmul.f32 %v196, 1.442695
    %v273 = vpow.pop %v272
    %v274 = vmul.f32 %v201, 1.442695
    %v275 = vpow.pop %v274
    %v276 = vmul.f32 %v206, 1.442695
    %v277 = vpow.pop %v276
    %v278 = vmul.f32 %v211, 1.442695
    %v279 = vpow.pop %v278
    %v280 = vmul.f32 %v216, 1.442695
    %v281 = vpow.pop %v280
    %v282 = vmul.f32 %v221, 1.442695
    %v283 = vpow.pop %v282
    %v284 = vmul.f32 %v226, 1.442695
    %v285 = vpow.pop %v284
    %v286 = vmul.f32 %v231, 1.442695
    %v287 = vpow.pop %v286
    %v288 = vmul.f32 %v236, 1.442695
    %v289 = vpow.pop %v288
    %v290 = vmul.f32 %v241, 1.442695
    %v291 = vpow.pop %v290
    %v292 = vsub.f32 %v261, 1.0
    %v293 = vsub.f32 %v263, 1.0
    %v294 = vsub.f32 %v265, 1.0
    %v295 = vsub.f32 %v267, 1.0
    %v296 = vsub.f32 %v269, 1.0
    %v297 = vsub.f32 %v271, 1.0
    %v298 = vsub.f32 %v273, 1.0
    %v299 = vsub.f32 %v275, 1.0
    %v300 = vsub.f32 %v277, 1.0
    %v301 = vsub.f32 %v279, 1.0
    %v302 = vsub.f32 %v281, 1.0
    %v303 = vsub.f32 %v283, 1.0
    %v304 = vsub.f32 %v285, 1.0
    %v305 = vsub.f32 %v287, 1.0
    %v306 = vsub.f32 %v289, 1.0
    %v307 = vsub.f32 %v291, 1.0
    %v308 = vmul.f32 %v292, 1.6732632
    %v309 = vmul.f32 %v293, 1.6732632
    %v310 = vmul.f32 %v294, 1.6732632
    %v311 = vmul.f32 %v295, 1.6732632
    %v312 = vmul.f32 %v296, 1.6732632
    %v313 = vmul.f32 %v297, 1.6732632
    %v314 = vmul.f32 %v298, 1.6732632
    %v315 = vmul.f32 %v299, 1.6732632
    %v316 = vmul.f32 %v300, 1.6732632
    %v317 = vmul.f32 %v301, 1.6732632
    %v318 = vmul.f32 %v302, 1.6732632
    %v319 = vmul.f32 %v303, 1.6732632
    %v320 = vmul.f32 %v304, 1.6732632
    %v321 = vmul.f32 %v305, 1.6732632
    %v322 = vmul.f32 %v306, 1.6732632
    %v323 = vmul.f32 %v307, 1.6732632
    %v324 = vsel %vm244, %v166, %v308
    %v325 = vsel %vm245, %v171, %v309
    %v326 = vsel %vm246, %v176, %v310
    %v327 = vsel %vm247, %v181, %v311
    %v328 = vsel %vm248, %v186, %v312
    %v329 = vsel %vm249, %v191, %v313
    %v330 = vsel %vm250, %v196, %v314
    %v331 = vsel %vm251, %v201, %v315
    %v332 = vsel %vm252, %v206, %v316
    %v333 = vsel %vm253, %v211, %v317
    %v334 = vsel %vm254, %v216, %v318
    %v335 = vsel %vm255, %v221, %v319
    %v336 = vsel %vm256, %v226, %v320
    %v337 = vsel %vm257, %v231, %v321
    %v338 = vsel %vm258, %v236, %v322
    %v339 = vsel %vm259, %v241, %v323
    %v340 = vmul.f32 %v324, 1.050701
    %v341 = vmul.f32 %v325, 1.050701
    %v342 = vmul.f32 %v326, 1.050701
    %v343 = vmul.f32 %v327, 1.050701
    %v344 = vmul.f32 %v328, 1.050701
    %v345 = vmul.f32 %v329, 1.050701
    %v346 = vmul.f32 %v330, 1.050701
    %v347 = vmul.f32 %v331, 1.050701
    %v348 = vmul.f32 %v332, 1.050701
    %v349 = vmul.f32 %v333, 1.050701
    %v350 = vmul.f32 %v334, 1.050701
    %v351 = vmul.f32 %v335, 1.050701
    %v352 = vmul.f32 %v336, 1.050701
    %v353 = vmul.f32 %v337, 1.050701
    %v354 = vmul.f32 %v338, 1.050701
    %v355 = vmul.f32 %v339, 1.050701
    %v356 = vld [vmem:[%s3] sm:$0x1]
    %v357 = vld [vmem:[#allocation2] sm:$0x1]
    %359 = vset.pattern.permute.xlu0 0
    %360 = vperm.xlu0 %359, %v357
    %v361 = vpop.permute.xlu0 %360
    %v363 = vlaneseq
    %v364 = vshrl.u32 %v363, 7
    %v365 = vsub.s32 0, %v364
    %v366 = vrot.slane %v361, %v365
    %v368 = vsel %vm50, %v356, 0
    %v371 = vsel %vm50, %v340, 0
    %v374 = vsel %vm50, %v341, 0
    %v377 = vsel %vm50, %v342, 0
    %v380 = vsel %vm50, %v343, 0
    %v383 = vsel %vm50, %v344, 0
    %v386 = vsel %vm50, %v345, 0
    %v389 = vsel %vm50, %v346, 0
    %v392 = vsel %vm50, %v347, 0
    %v395 = vsel %vm50, %v348, 0
    %v398 = vsel %vm50, %v349, 0
    %v401 = vsel %vm50, %v350, 0
    %v404 = vsel %vm50, %v351, 0
    %v407 = vsel %vm50, %v352, 0
    %v410 = vsel %vm50, %v353, 0
    %v413 = vsel %vm50, %v354, 0
    %v416 = vsel %vm50, %v355, 0
    %418 = vmatprep.subr.mxu0 0.0
    %419 = vmatpush1.xpose.msra.mxu0 %v416
    %420 = vmatprep.subr.mxu0 0.0
    %421 = vmatpush1.xpose.msra.mxu0 %v413
    %422 = vmatprep.subr.mxu0 0.0
    %423 = vmatpush1.xpose.msra.mxu0 %v410
    %424 = vmatprep.subr.mxu0 0.0
    %425 = vmatpush1.xpose.msra.mxu0 %v407
    %426 = vmatprep.subr.mxu0 0.0
    %427 = vmatpush1.xpose.msra.mxu0 %v404
    %428 = vmatprep.subr.mxu0 0.0
    %429 = vmatpush1.xpose.msra.mxu0 %v401
    %430 = vmatprep.subr.mxu0 0.0
    %431 = vmatpush1.xpose.msra.mxu0 %v398
    %432 = vmatprep.subr.mxu0 0.0
    %433 = vmatpush1.xpose.msra.mxu0 %v395
    %434 = vmatprep.subr.mxu0 0.0
    %435 = vmatpush1.xpose.msra.mxu0 %v392
    %436 = vmatprep.subr.mxu0 0.0
    %437 = vmatpush1.xpose.msra.mxu0 %v389
    %438 = vmatprep.subr.mxu0 0.0
    %439 = vmatpush1.xpose.msra.mxu0 %v386
    %440 = vmatprep.subr.mxu0 0.0
    %441 = vmatpush1.xpose.msra.mxu0 %v383
    %442 = vmatprep.subr.mxu0 0.0
    %443 = vmatpush1.xpose.msra.mxu0 %v380
    %444 = vmatprep.subr.mxu0 0.0
    %445 = vmatpush1.xpose.msra.mxu0 %v377
    %446 = vmatprep.subr.mxu0 0.0
    %447 = vmatpush1.xpose.msra.mxu0 %v374
    %448 = vmatprep.subr.mxu0 0.0
    %449 = vmatpush1.xpose.msra.mxu0 %v371
    %450 = vmatprep.subr.mxu0 0.0
    %451 = vmatpush2.xpose.msra.mxu0 0.0
    %452 = vmatprep.subr.mxu0 0.0
    %453 = vmatpush2.xpose.msra.mxu0 0.0
    %454 = vmatprep.subr.mxu0 0.0
    %455 = vmatpush2.xpose.msra.mxu0 0.0
    %456 = vmatprep.subr.mxu0 0.0
    %457 = vmatpush2.xpose.msra.mxu0 0.0
    %458 = vmatprep.subr.mxu0 0.0
    %459 = vmatpush2.xpose.msra.mxu0 0.0
    %460 = vmatprep.subr.mxu0 0.0
    %461 = vmatpush2.xpose.msra.mxu0 0.0
    %462 = vmatprep.subr.mxu0 0.0
    %463 = vmatpush2.xpose.msra.mxu0 0.0
    %464 = vmatprep.subr.mxu0 0.0
    %465 = vmatpush2.xpose.msra.mxu0 0.0
    %466 = vmatprep.subr.mxu0 0.0
    %467 = vmatpush2.xpose.msra.mxu0 0.0
    %468 = vmatprep.subr.mxu0 0.0
    %469 = vmatpush2.xpose.msra.mxu0 0.0
    %470 = vmatprep.subr.mxu0 0.0
    %471 = vmatpush2.xpose.msra.mxu0 0.0
    %472 = vmatprep.subr.mxu0 0.0
    %473 = vmatpush2.xpose.msra.mxu0 0.0
    %474 = vmatprep.subr.mxu0 0.0
    %475 = vmatpush2.xpose.msra.mxu0 0.0
    %476 = vmatprep.subr.mxu0 0.0
    %477 = vmatpush2.xpose.msra.mxu0 0.0
    %478 = vmatprep.subr.mxu0 0.0
    %479 = vmatpush2.xpose.msra.mxu0 0.0
    %480 = vmatprep.subr.mxu0 0.0
    %481 = vmatpush2.xpose.msra.mxu0 0.0
    %482 = vmatprep.mubr.f32.mxu0 0.0
    %483 = vmatmul.mubr.f32.gmra.mxu0 %v368
    %v484 = vpop.f32.mrf.mxu0
    %v485 = vadd.f32 %v366, %v484
    %v486 = vpop.f32.mrf.mxu0
    %487 = vdwg.mxu0
    %v488 = vand.u32 2147483647, %v485
    %v489 = vsub.f32 0.0, %v488
    %v490 = vmul.f32 %v489, 1.442695
    %v491 = vpow.pop %v490
    %v492 = vadd.f32 %v491, 1.0
    %v493 = vrcp.pop %v492
    %vm494 = vcmp.ge.f32.partialorder %v485, 0.0
    %v495 = vmul.f32 %v491, %v493
    %v496 = vsel %vm494, %v493, %v495
    %v497 = vsub.f32 1.0, %v496
    %498 = vst [vmem:[#allocation3] sm:$0x1] %v497
    %499 = vst [vmem:[#allocation3 + $0x1] sm:$0x1] %v496
    // Predicated region
    $region22: #{tpu_custom_call.1} parent=1 // pred_check
      _
    $region23: #{tpu_custom_call.1} parent=1 // pred_check_branch
      %501 = sbr.rel (0) target = $region25
    $region24: #{tpu_custom_call.1} parent=1 // pred_region
      %s503 = ssub.s32 32, 32
      %504 = vsyncadd [#allocation4], %s503
      %s506 = sshll.u32 [#allocation3], 4
      %s507 = int_to_ptr.vmem [resolvable:$true] %s506
      %509 = dma.vmem_to_hbm [thread:$0]  %s507, 32, %s5, [#allocation4]
    $region25: #{tpu_custom_call.1} parent=1 // pred_fallthru
      _
    // Predicated region
    $region26: #{tpu_custom_call.1} parent=1 // pred_check
      _
    $region27: #{tpu_custom_call.1} parent=1 // pred_check_branch
      %511 = sbr.rel (0) target = $region29
    $region28: #{tpu_custom_call.1} parent=1 // pred_region
      %512 = dma.done [#allocation4], 32
    $region29: #{tpu_custom_call.1} parent=1 // pred_fallthru
      _
    %513 = vsyncpa [#allocation4], 1

</llo_original>
